<compile_context>
chip_gen: v7x
topology: tpu7x:2x2x1
jax: 0.10.0
libtpu: 0.0.40
codegen_flags: <defaults>
</compile_context>

<pallas_src>
import jax
import jax.numpy as jnp
from jax import lax
from jax.experimental import pallas as pl
from jax.experimental.pallas import tpu as pltpu

_INV_SQRT2 = 0.7071067811865476
_EPS = 1e-5
_VMEM_LIMIT_BYTES = 48 * 1024 * 1024   # explicit; < 64 MiB (v7x physical), > v5e default


# ---------------------------------------------------------------------------
# tiling helper
# ---------------------------------------------------------------------------
def _spatial_tile(s, batch, max_tile=2048, min_steps=2):
    """Largest 128-multiple tile dividing `s` (<= max_tile) that still leaves
    batch * (s // tile) >= min_steps grid steps (megacore / dual TC).
    Falls back to the full dim when `s` is not a multiple of 128 (a full-dim
    block is always legal)."""
    limit = min(s, max_tile)
    cands = [t for t in range(128, limit + 1, 128) if s % t == 0]
    if not cands:
        # TODO(synk): for very large spatial extents that are not 128-divisible
        # a ragged-tile path would be needed; fine at these shapes.
        return s
    ok = [t for t in cands if batch * (s // t) >= min_steps]
    return max(ok) if ok else max(cands)


def _cparams(n_grid_dims):
    return pltpu.CompilerParams(
        dimension_semantics=("parallel",) * n_grid_dims,
        vmem_limit_bytes=_VMEM_LIMIT_BYTES,
    )


# ---------------------------------------------------------------------------
# Kernel A: fused split -> (1x1 conv + bias) -> GELU -> concat
#           one block-diagonal channel-major GEMM  W[c2,c2] @ x[c2, ts]
# ---------------------------------------------------------------------------
def _init_conv_gelu_kernel(x_ref, w_ref, b_ref, o_ref):
    acc = jnp.dot(w_ref[...], x_ref[0], preferred_element_type=jnp.float32)
    acc = acc + b_ref[...]                      # (c2,1) broadcast over lanes
    # exact GELU (PyTorch nn.GELU default): 0.5*x*(1+erf(x/sqrt(2)))
    o_ref[0] = (0.5 * acc * (1.0 + lax.erf(acc * _INV_SQRT2))).astype(o_ref.dtype)


def _init_conv_gelu(x_cm, w, b, *, max_tile=2048):
    B, c2, HW = x_cm.shape
    ts = _spatial_tile(HW, B, max_tile=max_tile)
    return pl.pallas_call(
        _init_conv_gelu_kernel,
        out_shape=jax.ShapeDtypeStruct((B, c2, HW), jnp.float32),
        grid_spec=pltpu.PrefetchScalarGridSpec(
            num_scalar_prefetch=0,
            grid=(B, HW // ts),
            in_specs=[
                pl.BlockSpec((1, c2, ts), lambda bi, j: (bi, 0, j)),
                pl.BlockSpec((c2, c2), lambda bi, j: (0, 0)),
                pl.BlockSpec((c2, 1), lambda bi, j: (0, 0)),
            ],
            out_specs=pl.BlockSpec((1, c2, ts), lambda bi, j: (bi, 0, j)),
        ),
        compiler_params=_cparams(2),
    )(x_cm, w, b)


# ---------------------------------------------------------------------------
# Kernel B: frequency-domain 1x1 conv (no bias) + BN(eval) + ReLU
#           single merged K=2*c2 GEMM, two separate lane-dense outputs (gr, gi)
# ---------------------------------------------------------------------------
def _freq_conv_bn_relu_kernel(f_ref, w_ref, sr_ref, tr_ref, si_ref, ti_ref,
                              gr_ref, gi_ref):
    c2 = gr_ref.shape[1]
    acc = jnp.dot(w_ref[...], f_ref[0], preferred_element_type=jnp.float32)   # (c4, ts)
    zr = acc[:c2] * sr_ref[...] + tr_ref[...]
    zi = acc[c2:] * si_ref[...] + ti_ref[...]
    gr_ref[0] = jnp.maximum(zr, 0.0).astype(gr_ref.dtype)
    gi_ref[0] = jnp.maximum(zi, 0.0).astype(gi_ref.dtype)


def _freq_conv_bn_relu(f_cm, w, s_r, t_r, s_i, t_i, *, max_tile=2048):
    B, c4, S = f_cm.shape
    c2 = c4 // 2
    ts = _spatial_tile(S, B, max_tile=max_tile)
    return pl.pallas_call(
        _freq_conv_bn_relu_kernel,
        out_shape=(jax.ShapeDtypeStruct((B, c2, S), jnp.float32),
                   jax.ShapeDtypeStruct((B, c2, S), jnp.float32)),
        grid_spec=pltpu.PrefetchScalarGridSpec(
            num_scalar_prefetch=0,
            grid=(B, S // ts),
            in_specs=[
                pl.BlockSpec((1, c4, ts), lambda bi, j: (bi, 0, j)),
                pl.BlockSpec((c4, c4), lambda bi, j: (0, 0)),
                pl.BlockSpec((c2, 1), lambda bi, j: (0, 0)),
                pl.BlockSpec((c2, 1), lambda bi, j: (0, 0)),
                pl.BlockSpec((c2, 1), lambda bi, j: (0, 0)),
                pl.BlockSpec((c2, 1), lambda bi, j: (0, 0)),
            ],
            out_specs=[
                pl.BlockSpec((1, c2, ts), lambda bi, j: (bi, 0, j)),
                pl.BlockSpec((1, c2, ts), lambda bi, j: (bi, 0, j)),
            ],
        ),
        compiler_params=_cparams(2),
    )(f_cm, w, s_r, t_r, s_i, t_i)


# ---------------------------------------------------------------------------
# Kernel C: residual add + final BN(eval) + ReLU (channel-major elementwise)
# ---------------------------------------------------------------------------
def _residual_bn_relu_kernel(a_ref, b_ref, s_ref, t_ref, o_ref):
    z = a_ref[0] + b_ref[0]
    z = z * s_ref[...] + t_ref[...]
    o_ref[0] = jnp.maximum(z, 0.0).astype(o_ref.dtype)


def _residual_bn_relu(a_cm, b_cm, s, t, *, max_tile=2048):
    B, c2, HW = a_cm.shape
    ts = _spatial_tile(HW, B, max_tile=max_tile)
    return pl.pallas_call(
        _residual_bn_relu_kernel,
        out_shape=jax.ShapeDtypeStruct((B, c2, HW), jnp.float32),
        grid_spec=pltpu.PrefetchScalarGridSpec(
            num_scalar_prefetch=0,
            grid=(B, HW // ts),
            in_specs=[
                pl.BlockSpec((1, c2, ts), lambda bi, j: (bi, 0, j)),
                pl.BlockSpec((1, c2, ts), lambda bi, j: (bi, 0, j)),
                pl.BlockSpec((c2, 1), lambda bi, j: (0, 0)),
                pl.BlockSpec((c2, 1), lambda bi, j: (0, 0)),
            ],
            out_specs=pl.BlockSpec((1, c2, ts), lambda bi, j: (bi, 0, j)),
        ),
        compiler_params=_cparams(2),
    )(a_cm, b_cm, s, t)


# ---------------------------------------------------------------------------
# parameter preparation (one-time weight fusion / permutation / BN folding)
# ---------------------------------------------------------------------------
def prepare_freq_fusion_params(p, eps=_EPS):
    dim = p["dim"]
    c2, c4 = 2 * dim, 4 * dim

    # block-diagonal fused init-conv weight ([out, in], channel-major) + bias
    w_init = jnp.zeros((c2, c2), jnp.float32)
    w_init = w_init.at[:dim, :dim].set(p["w1"])
    w_init = w_init.at[dim:, dim:].set(p["w2"])
    b_init = jnp.concatenate([p["b1"], p["b2"]]).reshape(c2, 1)

    # concat(real, imag) channel ordering <-> PyTorch interleaved (c*2 + r)
    idx = jnp.concatenate([2 * jnp.arange(c2), 2 * jnp.arange(c2) + 1])
    w_freq = p["w_fu"][idx][:, idx]           # [out_concat, in_concat], K merged to c4

    s_all = p["fu_gamma"] / jnp.sqrt(p["fu_var"] + eps)
    t_all = p["fu_beta"] - p["fu_mean"] * s_all
    s_perm, t_perm = s_all[idx], t_all[idx]

    s2 = p["bn_gamma"] / jnp.sqrt(p["bn_var"] + eps)
    t2 = p["bn_beta"] - p["bn_mean"] * s2

    return dict(
        dim=dim,
        w_init=w_init, b_init=b_init,
        w_freq=w_freq,
        s_r=s_perm[:c2].reshape(c2, 1), t_r=t_perm[:c2].reshape(c2, 1),
        s_i=s_perm[c2:].reshape(c2, 1), t_i=t_perm[c2:].reshape(c2, 1),
        s_out=s2.reshape(c2, 1), t_out=t2.reshape(c2, 1),
    )


# ---------------------------------------------------------------------------
# full forward (NCHW in, NCHW out, no layout transposes anywhere)
# ---------------------------------------------------------------------------
def freq_fusion_forward(x_nchw, pp, *, max_tile=2048):
    dim = pp["dim"]
    c2, c4 = 2 * dim, 4 * dim
    B, C, H, W = x_nchw.shape
    assert C == c2, (C, c2)
    HW = H * W

    x_cm = x_nchw.reshape(B, c2, HW)                       # free reshape

    # fused split -> 1x1 conv + bias -> GELU -> concat
    x0_cm = _init_conv_gelu(x_cm, pp["w_init"], pp["b_init"], max_tile=max_tile)
    x0 = x0_cm.reshape(B, c2, H, W)

    # TODO(synk): rfft2/irfft2 have no Pallas TPU primitive; computed with
    # jnp.fft on native NCHW axes (no hidden moveaxis passes).
    ff = jnp.fft.rfft2(x0, norm="ortho")                   # [B, c2, H, Wf] complex64
    Wf = ff.shape[-1]
    HWf = H * Wf
    # real/imag extraction + channel concat fuse into a single XLA pass
    f_cm = jnp.concatenate([jnp.real(ff), jnp.imag(ff)], axis=1).reshape(B, c4, HWf)

    gr, gi = _freq_conv_bn_relu(f_cm, pp["w_freq"],
                                pp["s_r"], pp["t_r"], pp["s_i"], pp["t_i"],
                                max_tile=max_tile)
    ffc = (gr + 1j * gi).reshape(B, c2, H, Wf)
    spat = jnp.fft.irfft2(ffc, s=(H, W), norm="ortho")     # [B, c2, H, W]

    y = _residual_bn_relu(spat.reshape(B, c2, HW), x0_cm,
                          pp["s_out"], pp["t_out"], max_tile=max_tile)
    return y.reshape(B, c2, H, W)


# ---------------------------------------------------------------------------
# pure-JAX reference (mirrors the PyTorch module, eval-mode BN)
# ---------------------------------------------------------------------------
def _reference(x, p, eps=_EPS):
    dim = p["dim"]
    hp = lax.Precision.HIGHEST

    def gelu(t):
        return 0.5 * t * (1.0 + lax.erf(t * _INV_SQRT2))

    def conv1x1(z, w, b=None):
        y = jnp.einsum("oc,bchw->bohw", w, z, precision=hp)
        if b is not None:
            y = y + b[None, :, None, None]
        return y

    x1, x2 = x[:, :dim], x[:, dim:]
    x1 = gelu(conv1x1(x1, p["w1"], p["b1"]))
    x2 = gelu(conv1x1(x2, p["w2"], p["b2"]))
    x0 = jnp.concatenate([x1, x2], axis=1)

    B, C, H, W = x0.shape
    ff = jnp.fft.rfft2(x0, norm="ortho")
    f = jnp.stack([jnp.real(ff), jnp.imag(ff)], axis=2).reshape(B, 2 * C, H, -1)
    f = conv1x1(f, p["w_fu"])
    s = p["fu_gamma"] / jnp.sqrt(p["fu_var"] + eps)
    t = p["fu_beta"] - p["fu_mean"] * s
    f = jnp.maximum(f * s[None, :, None, None] + t[None, :, None, None], 0.0)
    f = f.reshape(B, C, 2, H, -1)
    out = jnp.fft.irfft2(f[:, :, 0] + 1j * f[:, :, 1], s=(H, W), norm="ortho")

    y = out + x0
    s2 = p["bn_gamma"] / jnp.sqrt(p["bn_var"] + eps)
    t2 = p["bn_beta"] - p["bn_mean"] * s2
    return jnp.maximum(y * s2[None, :, None, None] + t2[None, :, None, None], 0.0)


if __name__ == "__main__":
    B, dim, H, W = 2, 64, 16, 16       # x: [B, 2*dim, H, W] = [2, 128, 16, 16]
    c2, c4 = 2 * dim, 4 * dim

    key = jax.random.PRNGKey(0)
    ks = jax.random.split(key, 12)
    x = jax.random.normal(ks[0], (B, c2, H, W), dtype=jnp.float32)

    params = dict(
        dim=dim,
        # conv_init_1 / conv_init_2 (1x1 conv weights [out, in] + bias)
        w1=jax.random.normal(ks[1], (dim, dim), jnp.float32) / jnp.sqrt(1.0 * dim),
        b1=jax.random.normal(ks[2], (dim,), jnp.float32) * 0.02,
        w2=jax.random.normal(ks[3], (dim, dim), jnp.float32) / jnp.sqrt(1.0 * dim),
        b2=jax.random.normal(ks[4], (dim,), jnp.float32) * 0.02,
        # FourierUnit conv_layer (1x1, no bias) + its BatchNorm (eval stats)
        w_fu=jax.random.normal(ks[5], (c4, c4), jnp.float32) / jnp.sqrt(1.0 * c4),
        fu_gamma=1.0 + 0.1 * jax.random.normal(ks[6], (c4,), jnp.float32),
        fu_beta=0.1 * jax.random.normal(ks[7], (c4,), jnp.float32),
        fu_mean=0.1 * jax.random.normal(ks[8], (c4,), jnp.float32),
        fu_var=jax.random.uniform(ks[9], (c4,), jnp.float32, minval=0.5, maxval=1.5),
        # final BatchNorm (eval stats)
        bn_gamma=1.0 + 0.1 * jax.random.normal(ks[10], (c2,), jnp.float32),
        bn_beta=0.1 * jax.random.normal(ks[11], (c2,), jnp.float32),
        bn_mean=jnp.zeros((c2,), jnp.float32),
        bn_var=jnp.ones((c2,), jnp.float32),
    )

    pp = prepare_freq_fusion_params(params)   # one-time weight fusion/folding
    y = freq_fusion_forward(x, pp)
    y = jax.block_until_ready(y)

    y_ref = _reference(x, params)
    assert y.shape == (B, c2, H, W), y.shape
    err = float(jnp.max(jnp.abs(y - y_ref)))
    assert err < 2e-3, err

    print("KERNEL_OK")
</pallas_src>

<mosaic_0001>
module attributes {stable_mosaic.version = 11 : i64} {
  func.func @_init_conv_gelu_kernel(%arg0: i32, %arg1: i32, %arg2: memref<1x128x256xf32, #tpu.memory_space<vmem>>, %arg3: memref<128x128xf32, #tpu.memory_space<vmem>>, %arg4: memref<128x1xf32, #tpu.memory_space<vmem>>, %arg5: memref<1x128x256xf32, #tpu.memory_space<vmem>>) attributes {dimension_semantics = [#tpu.dimension_semantics<parallel>, #tpu.dimension_semantics<parallel>], iteration_bounds = array<i64: 2, 1>, scalar_prefetch = 0 : i64, scratch_operands = 0 : i64, tpu.core_type = #tpu.core_type<tc>, window_params = [{transform_indices = @transform_0, window_bounds = array<i64: 1, 128, 256>}, {pipeline_mode = #tpu.pipeline_mode<synchronous>, transform_indices = @transform_1, window_bounds = array<i64: 128, 128>}, {pipeline_mode = #tpu.pipeline_mode<synchronous>, transform_indices = @transform_2, window_bounds = array<i64: 128, 1>}, {transform_indices = @transform_3, window_bounds = array<i64: 1, 128, 256>}]} {
    %c0 = arith.constant 0 : index
    %c0_0 = arith.constant 0 : index
    %0 = vector.load %arg3[%c0, %c0_0] : memref<128x128xf32, #tpu.memory_space<vmem>>, vector<128x128xf32>
    %c0_1 = arith.constant 0 : index
    %c0_2 = arith.constant 0 : index
    %c0_3 = arith.constant 0 : index
    %1 = vector.load %arg2[%c0_1, %c0_2, %c0_3] : memref<1x128x256xf32, #tpu.memory_space<vmem>>, vector<1x128x256xf32>
    %2 = vector.shape_cast %1 : vector<1x128x256xf32> to vector<128x256xf32>
    %cst = arith.constant dense<0.000000e+00> : vector<128x256xf32>
    %3 = tpu.matmul %0, %2, %cst {dimension_numbers = #tpu.dot_dimension_numbers<[1], [0], [0], [1], [0, 0, 1, 1], [], []>} : vector<128x128xf32>, vector<128x256xf32>, vector<128x256xf32> -> vector<128x256xf32>
    %c0_4 = arith.constant 0 : index
    %c0_5 = arith.constant 0 : index
    %4 = vector.load %arg4[%c0_4, %c0_5] : memref<128x1xf32, #tpu.memory_space<vmem>>, vector<128x1xf32>
    %5 = vector.broadcast %4 : vector<128x1xf32> to vector<128x256xf32>
    %6 = arith.addf %3, %5 : vector<128x256xf32>
    %cst_6 = arith.constant 5.000000e-01 : f32
    %7 = vector.broadcast %cst_6 : f32 to vector<128x256xf32>
    %8 = arith.mulf %7, %6 : vector<128x256xf32>
    %cst_7 = arith.constant 0.707106769 : f32
    %9 = vector.broadcast %cst_7 : f32 to vector<128x256xf32>
    %10 = arith.mulf %6, %9 : vector<128x256xf32>
    %11 = math.erf %10 : vector<128x256xf32>
    %cst_8 = arith.constant 1.000000e+00 : f32
    %12 = vector.broadcast %cst_8 : f32 to vector<128x256xf32>
    %13 = arith.addf %12, %11 : vector<128x256xf32>
    %14 = arith.mulf %8, %13 : vector<128x256xf32>
    %c0_9 = arith.constant 0 : index
    %c0_10 = arith.constant 0 : index
    %c0_11 = arith.constant 0 : index
    %15 = vector.load %arg5[%c0_9, %c0_10, %c0_11] : memref<1x128x256xf32, #tpu.memory_space<vmem>>, vector<1x128x256xf32>
    %16 = vector.shape_cast %15 : vector<1x128x256xf32> to vector<128x256xf32>
    %17 = vector.shape_cast %14 : vector<128x256xf32> to vector<1x128x256xf32>
    tpu.vector_store %arg5[%c0_9, %c0_10, %c0_11], %17 {strides = array<i32>} : memref<1x128x256xf32, #tpu.memory_space<vmem>>, vector<1x128x256xf32>,
    return
  }
  func.func @transform_0(%arg0: i32, %arg1: i32) -> (i32, i32, i32) {
    %c0_i32 = arith.constant 0 : i32
    %c0_i32_0 = arith.constant 0 : i32
    return %arg0, %c0_i32, %arg1 : i32, i32, i32
  }
  func.func @transform_1(%arg0: i32, %arg1: i32) -> (i32, i32) {
    %c0_i32 = arith.constant 0 : i32
    %c0_i32_0 = arith.constant 0 : i32
    %c0_i32_1 = arith.constant 0 : i32
    return %c0_i32, %c0_i32_0 : i32, i32
  }
  func.func @transform_2(%arg0: i32, %arg1: i32) -> (i32, i32) {
    %c0_i32 = arith.constant 0 : i32
    %c0_i32_0 = arith.constant 0 : i32
    %c0_i32_1 = arith.constant 0 : i32
    return %c0_i32, %c0_i32_0 : i32, i32
  }
  func.func @transform_3(%arg0: i32, %arg1: i32) -> (i32, i32, i32) {
    %c0_i32 = arith.constant 0 : i32
    %c0_i32_0 = arith.constant 0 : i32
    return %arg0, %c0_i32, %arg1 : i32, i32, i32
  }
}

</mosaic_0001>

<llo_original>
// kernel: tpu_custom_call.1
$region0: #{tpu_custom_call.1}
  #allocation0 [shape = 'u32[]', space=smem, size = 0x4, offset = 0x4, fixed_abs, tag = 'smem constant byte address 0x4 - core index']
  #allocation1 [shape = 'u32[144,128]{1,0:T(1,128)}', space=vmem, size = 0x12000, scoped, tag = 'internal scratch']
  %s0 = inlined_call_operand.hbm [shape: f32[2,128,256], index: 0, kind: input, shape index: {}]
  %s1 = inlined_call_operand.vmem [shape: f32[128,128], index: 1, kind: input, shape index: {}]
  %s2 = inlined_call_operand.vmem [shape: f32[128,1], index: 2, kind: input, shape index: {}]
  %s3 = inlined_call_operand.hbm [shape: f32[2,128,256], index: 3, kind: output, shape index: {}]
  %s4 = sld [smem:[#allocation0]]
  $region49: #{tpu_custom_call.1} parent=0
    _
  %s6 = ssub.s32 1, %s4
  %s7 = scalar_select 0, %s6, %s4
  $region1: #{tpu_custom_call.1} parent=0
    #allocation2 [shape = 'u8[262144]{0}', space=vmem, size = 0x40000, scoped, tag = 'input window, operand 0']
    #allocation3 [shape = 's32[2]{0}', space=sflag, size = 0x8, scoped, tag = 'scoped memory for tpu_custom_call.1']
    #allocation4 [shape = 's32[2]{0}', space=sflag, size = 0x8, scoped, tag = 'scoped memory for tpu_custom_call.1']
    #allocation5 [shape = 'u8[262144]{0}', space=vmem, size = 0x40000, scoped, tag = 'output window, operand 0']
    %8 = vsyncpa [#allocation3], 0
    %s9 = scalar_lea.sflag [#allocation3], 1
    %10 = vsyncpa %s9, 0
    %11 = vsyncpa [#allocation4], 0
    %s12 = scalar_lea.sflag [#allocation4], 1
    %13 = vsyncpa %s12, 0
    loop: start=0, step=1, limit=4
    $region2: #{tpu_custom_call.1} parent=1 // loop_pre_header
      _
    $region3: #{tpu_custom_call.1} parent=1 // loop_header
      %s15 = sphi 0, %s19
      %p16 = scmp.ge.s32.totalorder %s15, 4
      %s22 = sphi 0, %s34
      %s23 = sphi 0, %s30
      %s24 = sphi 0, %s22
      %s25 = sphi 0, %s23
      %s26 = sphi 0, %s24
      %s27 = sphi 0, %s25
      %s39 = sphi 0, %s41
      %s42 = sphi 0, %s39
      %s43 = sphi 0, %s42
      %s59 = sphi 0, %s43
      %s63 = sphi 0, %s63
      %s65 = sphi 0, %s63
      %s66 = sphi 0, %s65
      %s80 = sphi 0, %s66
      %s84 = sphi 0, %s84
      %s86 = sphi 0, %s84
      %s87 = sphi 0, %s86
      %s101 = sphi 0, %s87
      %s109 = sphi 0, %s111
      %s112 = sphi 0, %s109
      %s113 = sphi 0, %s112
      %s129 = sphi 0, %s113
    $region4: #{tpu_custom_call.1} parent=1 // loop_header_branch
      %18 = sbr.rel (%p16) target = $region8
    $region5: #{tpu_custom_call.1} parent=1 // loop_body
      %s20 = ssub.s32 %s15, 1
      %s21 = ssub.s32 %s15, 2
      %s28 = sadd.s32 1, %s23
      %p29 = scmp.ge.s32.totalorder %s28, 1
      %s30 = scalar_select %p29, 0, %s28
      %s31 = sadd.s32 1, %s22
      %s32 = scalar_select %p29, %s31, %s22
      %p33 = scmp.ge.s32.totalorder %s32, 2
      %s34 = scalar_select %p33, 0, %s32
      %s35 = ssub.s32 %s22, %s34
      %s36 = ssub.s32 %s23, %s30
      %s37 = sor.u32 %s35, %s36
      %p38 = scmp.eq.s32.totalorder %s37, 0
      %s40 = sadd.s32 %s39, 1
      %s41 = scalar_select %p38, %s39, %s40
      %p44 = pneg %p38
      %p45 = scmp.eq.s32.totalorder %s15, 1
      %p46 = por %p44, %p45
      %p47 = scmp.ne.s32.totalorder %s39, %s42
      %p48 = scmp.eq.s32.totalorder %s15, 0
      %p49 = por %p47, %p48
      %p50 = scmp.ne.s32.totalorder %s39, %s42
      %p51 = scmp.eq.s32.totalorder %s20, 1
      %p52 = por %p50, %p51
      %p53 = scmp.ne.s32.totalorder %s42, %s43
      %p54 = scmp.eq.s32.totalorder %s20, 0
      %p55 = por %p53, %p54
      %p56 = scmp.ne.s32.totalorder %s42, %s43
      %p57 = scmp.eq.s32.totalorder %s21, 1
      %p58 = por %p56, %p57
      %p60 = scmp.ne.s32.totalorder %s43, %s59
      %p61 = scmp.eq.s32.totalorder %s21, 0
      %p62 = por %p60, %p61
      %s64 = sadd.s32 %s63, 1
      %p67 = scmp.eq.s32.totalorder %s15, 1
      %p68 = scmp.ne.s32.totalorder %s63, %s65
      %p69 = scmp.eq.s32.totalorder %s15, 0
      %p70 = por %p68, %p69
      %p71 = scmp.ne.s32.totalorder %s63, %s65
      %p72 = scmp.eq.s32.totalorder %s20, 1
      %p73 = por %p71, %p72
      %p74 = scmp.ne.s32.totalorder %s65, %s66
      %p75 = scmp.eq.s32.totalorder %s20, 0
      %p76 = por %p74, %p75
      %p77 = scmp.ne.s32.totalorder %s65, %s66
      %p78 = scmp.eq.s32.totalorder %s21, 1
      %p79 = por %p77, %p78
      %p81 = scmp.ne.s32.totalorder %s66, %s80
      %p82 = scmp.eq.s32.totalorder %s21, 0
      %p83 = por %p81, %p82
      %s85 = sadd.s32 %s84, 1
      %p88 = scmp.eq.s32.totalorder %s15, 1
      %p89 = scmp.ne.s32.totalorder %s84, %s86
      %p90 = scmp.eq.s32.totalorder %s15, 0
      %p91 = por %p89, %p90
      %p92 = scmp.ne.s32.totalorder %s84, %s86
      %p93 = scmp.eq.s32.totalorder %s20, 1
      %p94 = por %p92, %p93
      %p95 = scmp.ne.s32.totalorder %s86, %s87
      %p96 = scmp.eq.s32.totalorder %s20, 0
      %p97 = por %p95, %p96
      %p98 = scmp.ne.s32.totalorder %s86, %s87
      %p99 = scmp.eq.s32.totalorder %s21, 1
      %p100 = por %p98, %p99
      %p102 = scmp.ne.s32.totalorder %s87, %s101
      %p103 = scmp.eq.s32.totalorder %s21, 0
      %p104 = por %p102, %p103
      %s105 = ssub.s32 %s22, %s34
      %s106 = ssub.s32 %s23, %s30
      %s107 = sor.u32 %s105, %s106
      %p108 = scmp.eq.s32.totalorder %s107, 0
      %s110 = sadd.s32 %s109, 1
      %s111 = scalar_select %p108, %s109, %s110
      %p114 = pneg %p108
      %p115 = scmp.eq.s32.totalorder %s15, 1
      %p116 = por %p114, %p115
      %p117 = scmp.ne.s32.totalorder %s109, %s112
      %p118 = scmp.eq.s32.totalorder %s15, 0
      %p119 = por %p117, %p118
      %p120 = scmp.ne.s32.totalorder %s109, %s112
      %p121 = scmp.eq.s32.totalorder %s20, 1
      %p122 = por %p120, %p121
      %p123 = scmp.ne.s32.totalorder %s112, %s113
      %p124 = scmp.eq.s32.totalorder %s20, 0
      %p125 = por %p123, %p124
      %p126 = scmp.ne.s32.totalorder %s112, %s113
      %p127 = scmp.eq.s32.totalorder %s21, 1
      %p128 = por %p126, %p127
      %p130 = scmp.ne.s32.totalorder %s113, %s129
      %p131 = scmp.eq.s32.totalorder %s21, 0
      %p132 = por %p130, %p131
      %p133 = scmp.le.s32.totalorder 1, %s15
      %p134 = scmp.lt.s32.totalorder %s15, 3
      %p135 = pnand %p133, %p134
      %p136 = pneg %p135
      // Predicated region
      $region9: #{tpu_custom_call.1} parent=5 // pred_check
        _
      $region10: #{tpu_custom_call.1} parent=5 // pred_check_branch
        %138 = sbr.rel (%p135) target = $region12
      $region11: #{tpu_custom_call.1} parent=5 // pred_region
        %s139 = ssub.s32 %s15, 1
        // Predicated region
        $region13: #{tpu_custom_call.1} parent=11 // pred_check
          %p140 = pneg %p76
        $region14: #{tpu_custom_call.1} parent=11 // pred_check_branch
          %142 = sbr.rel (%p140) target = $region16
        $region15: #{tpu_custom_call.1} parent=11 // pred_region
          _
        $region16: #{tpu_custom_call.1} parent=11 // pred_fallthru
          _
        // Predicated region
        $region17: #{tpu_custom_call.1} parent=11 // pred_check
          %p143 = pneg %p97
        $region18: #{tpu_custom_call.1} parent=11 // pred_check_branch
          %145 = sbr.rel (%p143) target = $region20
        $region19: #{tpu_custom_call.1} parent=11 // pred_region
          _
        $region20: #{tpu_custom_call.1} parent=11 // pred_fallthru
          _
      $region12: #{tpu_custom_call.1} parent=5 // pred_fallthru
        _
      %p146 = scmp.lt.s32.totalorder %s15, 2
      // Predicated region
      $region21: #{tpu_custom_call.1} parent=5 // pred_check
        %p147 = pneg %p146
      $region22: #{tpu_custom_call.1} parent=5 // pred_check_branch
        %149 = sbr.rel (%p147) target = $region24
      $region23: #{tpu_custom_call.1} parent=5 // pred_region
        // Predicated region
        $region25: #{tpu_custom_call.1} parent=23 // pred_check
          %p150 = pneg %p49
        $region26: #{tpu_custom_call.1} parent=23 // pred_check_branch
          %152 = sbr.rel (%p150) target = $region28
        $region27: #{tpu_custom_call.1} parent=23 // pred_region
          %s153 = sand.u32 %s39, 1
          %s154 = scalar_lea.sflag [#allocation3], %s153
          %s155 = sand.u32 %s39, 1
          %s156 = smul.addr %s155, 256
          %s157 = scalar_lea.vmem [#allocation2], %s156
          %s158 = smul.u32 2, %s23
          %s160 = ssub.s32 4096, 4096
          %161 = vsyncadd %s154, %s160
          %s162 = smul.addr %s22, 32
          %s163 = sadd.s32 %s158, %s162
          %s164 = smul.addr %s163, 128
          %s165 = scalar_lea.hbm %s0, %s164
          %s166 = sshll.u32 %s157, 4
          %s167 = int_to_ptr.vmem [resolvable:$true] %s166
          %172 = dma.hbm_to_vmem [thread:$0]  %s165, 4096, %s167, %s154, 256, 256, 16
        $region28: #{tpu_custom_call.1} parent=23 // pred_fallthru
          _
      $region24: #{tpu_custom_call.1} parent=5 // pred_fallthru
        _
      %p173 = scmp.le.s32.totalorder 1, %s15
      %p174 = scmp.lt.s32.totalorder %s15, 3
      %p175 = pnand %p173, %p174
      %p176 = pneg %p175
      // Predicated region
      $region29: #{tpu_custom_call.1} parent=5 // pred_check
        _
      $region30: #{tpu_custom_call.1} parent=5 // pred_check_branch
        %178 = sbr.rel (%p175) target = $region32
      $region31: #{tpu_custom_call.1} parent=5 // pred_region
        %s179 = ssub.s32 %s15, 1
        %s180 = sand.u32 %s42, 1
        %s181 = scalar_lea.sflag [#allocation3], %s180
        %s182 = sand.u32 %s42, 1
        %s183 = smul.addr %s182, 256
        %s184 = scalar_lea.vmem [#allocation2], %s183
        // Predicated region
        $region33: #{tpu_custom_call.1} parent=31 // pred_check
          %p185 = pneg %p55
        $region34: #{tpu_custom_call.1} parent=31 // pred_check_branch
          %187 = sbr.rel (%p185) target = $region36
        $region35: #{tpu_custom_call.1} parent=31 // pred_region
          %188 = dma.done %s181, 4096
        $region36: #{tpu_custom_call.1} parent=31 // pred_fallthru
          _
        %s189 = sand.u32 %s42, 1
        %s190 = scalar_lea.sflag [#allocation3], %s189
        %s191 = sand.u32 %s42, 1
        %s192 = smul.addr %s191, 256
        %s193 = scalar_lea.vmem [#allocation2], %s192
        %p194 = pneg %p55
        %p195 = pneg %p52
        %p196 = pneg %p76
        %p197 = pneg %p73
        %p198 = pneg %p97
        %p199 = pneg %p94
        %p200 = pneg %p125
        %p201 = pneg %p122
        %s202 = sand.u32 %s112, 1
        %s203 = scalar_lea.sflag [#allocation4], %s202
        %s204 = sand.u32 %s112, 1
        %s205 = smul.addr %s204, 256
        %s206 = scalar_lea.vmem [#allocation5], %s205
        %s207 = smul.u32 2, %s25
        %s208 = smul.u32 2, %s25
        %v209 = vld [vmem:[%s1] sm:$0xff]
        %v210 = vld [vmem:[%s1 + $0x8] sm:$0xff]
        %v211 = vld [vmem:[%s1 + $0x10] sm:$0xff]
        %v212 = vld [vmem:[%s1 + $0x18] sm:$0xff]
        %v213 = vld [vmem:[%s1 + $0x20] sm:$0xff]
        %v214 = vld [vmem:[%s1 + $0x28] sm:$0xff]
        %v215 = vld [vmem:[%s1 + $0x30] sm:$0xff]
        %v216 = vld [vmem:[%s1 + $0x38] sm:$0xff]
        %v217 = vld [vmem:[%s1 + $0x40] sm:$0xff]
        %v218 = vld [vmem:[%s1 + $0x48] sm:$0xff]
        %v219 = vld [vmem:[%s1 + $0x50] sm:$0xff]
        %v220 = vld [vmem:[%s1 + $0x58] sm:$0xff]
        %v221 = vld [vmem:[%s1 + $0x60] sm:$0xff]
        %v222 = vld [vmem:[%s1 + $0x68] sm:$0xff]
        %v223 = vld [vmem:[%s1 + $0x70] sm:$0xff]
        %v224 = vld [vmem:[%s1 + $0x78] sm:$0xff]
        %v225 = vld [vmem:[%s184] sm:$0xff]
        %v226 = vld [vmem:[%s184 + $0x8] sm:$0xff]
        %v227 = vld [vmem:[%s184 + $0x10] sm:$0xff]
        %v228 = vld [vmem:[%s184 + $0x18] sm:$0xff]
        %v229 = vld [vmem:[%s184 + $0x20] sm:$0xff]
        %v230 = vld [vmem:[%s184 + $0x28] sm:$0xff]
        %v231 = vld [vmem:[%s184 + $0x30] sm:$0xff]
        %v232 = vld [vmem:[%s184 + $0x38] sm:$0xff]
        %v233 = vld [vmem:[%s184 + $0x40] sm:$0xff]
        %v234 = vld [vmem:[%s184 + $0x48] sm:$0xff]
        %v235 = vld [vmem:[%s184 + $0x50] sm:$0xff]
        %v236 = vld [vmem:[%s184 + $0x58] sm:$0xff]
        %v237 = vld [vmem:[%s184 + $0x60] sm:$0xff]
        %v238 = vld [vmem:[%s184 + $0x68] sm:$0xff]
        %v239 = vld [vmem:[%s184 + $0x70] sm:$0xff]
        %v240 = vld [vmem:[%s184 + $0x78] sm:$0xff]
        %v241 = vld [vmem:[%s184 + $0x80] sm:$0xff]
        %v242 = vld [vmem:[%s184 + $0x88] sm:$0xff]
        %v243 = vld [vmem:[%s184 + $0x90] sm:$0xff]
        %v244 = vld [vmem:[%s184 + $0x98] sm:$0xff]
        %v245 = vld [vmem:[%s184 + $0xa0] sm:$0xff]
        %v246 = vld [vmem:[%s184 + $0xa8] sm:$0xff]
        %v247 = vld [vmem:[%s184 + $0xb0] sm:$0xff]
        %v248 = vld [vmem:[%s184 + $0xb8] sm:$0xff]
        %v249 = vld [vmem:[%s184 + $0xc0] sm:$0xff]
        %v250 = vld [vmem:[%s184 + $0xc8] sm:$0xff]
        %v251 = vld [vmem:[%s184 + $0xd0] sm:$0xff]
        %v252 = vld [vmem:[%s184 + $0xd8] sm:$0xff]
        %v253 = vld [vmem:[%s184 + $0xe0] sm:$0xff]
        %v254 = vld [vmem:[%s184 + $0xe8] sm:$0xff]
        %v255 = vld [vmem:[%s184 + $0xf0] sm:$0xff]
        %v256 = vld [vmem:[%s184 + $0xf8] sm:$0xff]
        %v257 = vld [vmem:[%s2] sm:$0xff]
        %v258 = vld [vmem:[%s2 + $0x8] sm:$0xff]
        %v259 = vld [vmem:[%s2 + $0x10] sm:$0xff]
        %v260 = vld [vmem:[%s2 + $0x18] sm:$0xff]
        %v261 = vld [vmem:[%s2 + $0x20] sm:$0xff]
        %v262 = vld [vmem:[%s2 + $0x28] sm:$0xff]
        %v263 = vld [vmem:[%s2 + $0x30] sm:$0xff]
        %v264 = vld [vmem:[%s2 + $0x38] sm:$0xff]
        %v265 = vld [vmem:[%s2 + $0x40] sm:$0xff]
        %v266 = vld [vmem:[%s2 + $0x48] sm:$0xff]
        %v267 = vld [vmem:[%s2 + $0x50] sm:$0xff]
        %v268 = vld [vmem:[%s2 + $0x58] sm:$0xff]
        %v269 = vld [vmem:[%s2 + $0x60] sm:$0xff]
        %v270 = vld [vmem:[%s2 + $0x68] sm:$0xff]
        %v271 = vld [vmem:[%s2 + $0x70] sm:$0xff]
        %v272 = vld [vmem:[%s2 + $0x78] sm:$0xff]
        %274 = vset.pattern.permute.xlu0 0
        %275 = vperm.xlu0 %274, %v257
        %v276 = vpop.permute.xlu0 %275
        %279 = vset.pattern.permute.xlu0 0
        %280 = vperm.xlu0 %279, %v258
        %v281 = vpop.permute.xlu0 %280
        %284 = vset.pattern.permute.xlu0 0
        %285 = vperm.xlu0 %284, %v259
        %v286 = vpop.permute.xlu0 %285
        %289 = vset.pattern.permute.xlu0 0
        %290 = vperm.xlu0 %289, %v260
        %v291 = vpop.permute.xlu0 %290
        %294 = vset.pattern.permute.xlu0 0
        %295 = vperm.xlu0 %294, %v261
        %v296 = vpop.permute.xlu0 %295
        %299 = vset.pattern.permute.xlu0 0
        %300 = vperm.xlu0 %299, %v262
        %v301 = vpop.permute.xlu0 %300
        %304 = vset.pattern.permute.xlu0 0
        %305 = vperm.xlu0 %304, %v263
        %v306 = vpop.permute.xlu0 %305
        %309 = vset.pattern.permute.xlu0 0
        %310 = vperm.xlu0 %309, %v264
        %v311 = vpop.permute.xlu0 %310
        %314 = vset.pattern.permute.xlu0 0
        %315 = vperm.xlu0 %314, %v265
        %v316 = vpop.permute.xlu0 %315
        %319 = vset.pattern.permute.xlu0 0
        %320 = vperm.xlu0 %319, %v266
        %v321 = vpop.permute.xlu0 %320
        %324 = vset.pattern.permute.xlu0 0
        %325 = vperm.xlu0 %324, %v267
        %v326 = vpop.permute.xlu0 %325
        %329 = vset.pattern.permute.xlu0 0
        %330 = vperm.xlu0 %329, %v268
        %v331 = vpop.permute.xlu0 %330
        %334 = vset.pattern.permute.xlu0 0
        %335 = vperm.xlu0 %334, %v269
        %v336 = vpop.permute.xlu0 %335
        %339 = vset.pattern.permute.xlu0 0
        %340 = vperm.xlu0 %339, %v270
        %v341 = vpop.permute.xlu0 %340
        %344 = vset.pattern.permute.xlu0 0
        %345 = vperm.xlu0 %344, %v271
        %v346 = vpop.permute.xlu0 %345
        %349 = vset.pattern.permute.xlu0 0
        %350 = vperm.xlu0 %349, %v272
        %v351 = vpop.permute.xlu0 %350
        %353 = vmatprep.subr.mxu0 %v226
        %354 = vmatpush1.msra.mxu0 %v225
        %355 = vmatprep.subr.mxu0 %v228
        %356 = vmatpush1.msra.mxu0 %v227
        %357 = vmatprep.subr.mxu0 %v230
        %358 = vmatpush1.msra.mxu0 %v229
        %359 = vmatprep.subr.mxu0 %v232
        %360 = vmatpush1.msra.mxu0 %v231
        %361 = vmatprep.subr.mxu0 %v234
        %362 = vmatpush1.msra.mxu0 %v233
        %363 = vmatprep.subr.mxu0 %v236
        %364 = vmatpush1.msra.mxu0 %v235
        %365 = vmatprep.subr.mxu0 %v238
        %366 = vmatpush1.msra.mxu0 %v237
        %367 = vmatprep.subr.mxu0 %v240
        %368 = vmatpush1.msra.mxu0 %v239
        %369 = vmatprep.subr.mxu0 %v242
        %370 = vmatpush1.msra.mxu0 %v241
        %371 = vmatprep.subr.mxu0 %v244
        %372 = vmatpush1.msra.mxu0 %v243
        %373 = vmatprep.subr.mxu0 %v246
        %374 = vmatpush1.msra.mxu0 %v245
        %375 = vmatprep.subr.mxu0 %v248
        %376 = vmatpush1.msra.mxu0 %v247
        %377 = vmatprep.subr.mxu0 %v250
        %378 = vmatpush1.msra.mxu0 %v249
        %379 = vmatprep.subr.mxu0 %v252
        %380 = vmatpush1.msra.mxu0 %v251
        %381 = vmatprep.subr.mxu0 %v254
        %382 = vmatpush1.msra.mxu0 %v253
        %383 = vmatprep.subr.mxu0 %v256
        %384 = vmatpush1.msra.mxu0 %v255
        %385 = vmatprep.subr.mxu0 0.0
        %386 = vmatpush1.msra.mxu0 0.0
        %387 = vmatprep.subr.mxu0 0.0
        %388 = vmatpush1.msra.mxu0 0.0
        %389 = vmatprep.subr.mxu0 0.0
        %390 = vmatpush1.msra.mxu0 0.0
        %391 = vmatprep.subr.mxu0 0.0
        %392 = vmatpush1.msra.mxu0 0.0
        %393 = vmatprep.subr.mxu0 0.0
        %394 = vmatpush1.msra.mxu0 0.0
        %395 = vmatprep.subr.mxu0 0.0
        %396 = vmatpush1.msra.mxu0 0.0
        %397 = vmatprep.subr.mxu0 0.0
        %398 = vmatpush1.msra.mxu0 0.0
        %399 = vmatprep.subr.mxu0 0.0
        %400 = vmatpush1.msra.mxu0 0.0
        %401 = vmatprep.subr.mxu0 0.0
        %402 = vmatpush1.msra.mxu0 0.0
        %403 = vmatprep.subr.mxu0 0.0
        %404 = vmatpush1.msra.mxu0 0.0
        %405 = vmatprep.subr.mxu0 0.0
        %406 = vmatpush1.msra.mxu0 0.0
        %407 = vmatprep.subr.mxu0 0.0
        %408 = vmatpush1.msra.mxu0 0.0
        %409 = vmatprep.subr.mxu0 0.0
        %410 = vmatpush1.msra.mxu0 0.0
        %411 = vmatprep.subr.mxu0 0.0
        %412 = vmatpush1.msra.mxu0 0.0
        %413 = vmatprep.subr.mxu0 0.0
        %414 = vmatpush1.msra.mxu0 0.0
        %415 = vmatprep.subr.mxu0 0.0
        %416 = vmatpush1.msra.mxu0 0.0
        %417 = vmatprep.mubr.f32.mxu0 0.0
        %418 = vmatmul.mubr.f32.gmra.mrb[0].mxu0 %v209
        %v419 = vpop.f32.mrb[0].mxu0
        %v420 = vadd.f32 %v276, %v419
        %v421 = vpop.f32.mrb[0].mxu0
        %v422 = vadd.f32 %v276, %v421
        %423 = vmatprep.mubr.f32.mxu0 0.0
        %424 = vmatmul.mubr.f32.gmra.mrb[0].mxu0 %v210
        %v425 = vpop.f32.mrb[0].mxu0
        %v426 = vadd.f32 %v281, %v425
        %v427 = vpop.f32.mrb[0].mxu0
        %v428 = vadd.f32 %v281, %v427
        %429 = vmatprep.mubr.f32.mxu0 0.0
        %430 = vmatmul.mubr.f32.gmra.mrb[0].mxu0 %v211
        %v431 = vpop.f32.mrb[0].mxu0
        %v432 = vadd.f32 %v286, %v431
        %v433 = vpop.f32.mrb[0].mxu0
        %v434 = vadd.f32 %v286, %v433
        %435 = vmatprep.mubr.f32.mxu0 0.0
        %436 = vmatmul.mubr.f32.gmra.mrb[0].mxu0 %v212
        %v437 = vpop.f32.mrb[0].mxu0
        %v438 = vadd.f32 %v291, %v437
        %v439 = vpop.f32.mrb[0].mxu0
        %v440 = vadd.f32 %v291, %v439
        %441 = vmatprep.mubr.f32.mxu0 0.0
        %442 = vmatmul.mubr.f32.gmra.mrb[0].mxu0 %v213
        %v443 = vpop.f32.mrb[0].mxu0
        %v444 = vadd.f32 %v296, %v443
        %v445 = vpop.f32.mrb[0].mxu0
        %v446 = vadd.f32 %v296, %v445
        %447 = vmatprep.mubr.f32.mxu0 0.0
        %448 = vmatmul.mubr.f32.gmra.mrb[0].mxu0 %v214
        %v449 = vpop.f32.mrb[0].mxu0
        %v450 = vadd.f32 %v301, %v449
        %v451 = vpop.f32.mrb[0].mxu0
        %v452 = vadd.f32 %v301, %v451
        %453 = vmatprep.mubr.f32.mxu0 0.0
        %454 = vmatmul.mubr.f32.gmra.mrb[0].mxu0 %v215
        %v455 = vpop.f32.mrb[0].mxu0
        %v456 = vadd.f32 %v306, %v455
        %v457 = vpop.f32.mrb[0].mxu0
        %v458 = vadd.f32 %v306, %v457
        %459 = vmatprep.mubr.f32.mxu0 0.0
        %460 = vmatmul.mubr.f32.gmra.mrb[0].mxu0 %v216
        %v461 = vpop.f32.mrb[0].mxu0
        %v462 = vadd.f32 %v311, %v461
        %v463 = vpop.f32.mrb[0].mxu0
        %v464 = vadd.f32 %v311, %v463
        %465 = vmatprep.mubr.f32.mxu0 0.0
        %466 = vmatmul.mubr.f32.gmra.mrb[0].mxu0 %v217
        %v467 = vpop.f32.mrb[0].mxu0
        %v468 = vadd.f32 %v316, %v467
        %v469 = vpop.f32.mrb[0].mxu0
        %v470 = vadd.f32 %v316, %v469
        %471 = vmatprep.mubr.f32.mxu0 0.0
        %472 = vmatmul.mubr.f32.gmra.mrb[0].mxu0 %v218
        %v473 = vpop.f32.mrb[0].mxu0
        %v474 = vadd.f32 %v321, %v473
        %v475 = vpop.f32.mrb[0].mxu0
        %v476 = vadd.f32 %v321, %v475
        %477 = vmatprep.mubr.f32.mxu0 0.0
        %478 = vmatmul.mubr.f32.gmra.mrb[0].mxu0 %v219
        %v479 = vpop.f32.mrb[0].mxu0
        %v480 = vadd.f32 %v326, %v479
        %v481 = vpop.f32.mrb[0].mxu0
        %v482 = vadd.f32 %v326, %v481
        %483 = vmatprep.mubr.f32.mxu0 0.0
        %484 = vmatmul.mubr.f32.gmra.mrb[0].mxu0 %v220
        %v485 = vpop.f32.mrb[0].mxu0
        %v486 = vadd.f32 %v331, %v485
        %v487 = vpop.f32.mrb[0].mxu0
        %v488 = vadd.f32 %v331, %v487
        %489 = vmatprep.mubr.f32.mxu0 0.0
        %490 = vmatmul.mubr.f32.gmra.mrb[0].mxu0 %v221
        %v491 = vpop.f32.mrb[0].mxu0
        %v492 = vadd.f32 %v336, %v491
        %v493 = vpop.f32.mrb[0].mxu0
        %v494 = vadd.f32 %v336, %v493
        %495 = vmatprep.mubr.f32.mxu0 0.0
        %496 = vmatmul.mubr.f32.gmra.mrb[0].mxu0 %v222
        %v497 = vpop.f32.mrb[0].mxu0
        %v498 = vadd.f32 %v341, %v497
        %v499 = vpop.f32.mrb[0].mxu0
        %v500 = vadd.f32 %v341, %v499
        %501 = vmatprep.mubr.f32.mxu0 0.0
        %502 = vmatmul.mubr.f32.gmra.mrb[0].mxu0 %v223
        %v503 = vpop.f32.mrb[0].mxu0
        %v504 = vadd.f32 %v346, %v503
        %v505 = vpop.f32.mrb[0].mxu0
        %v506 = vadd.f32 %v346, %v505
        %507 = vmatprep.mubr.f32.mxu0 0.0
        %508 = vmatmul.mubr.f32.gmra.mrb[0].mxu0 %v224
        %v509 = vpop.f32.mrb[0].mxu0
        %v510 = vadd.f32 %v351, %v509
        %v511 = vpop.f32.mrb[0].mxu0
        %v512 = vadd.f32 %v351, %v511
        %513 = vdwg.mxu0
        %v514 = vmul.f32 %v420, 0.5
        %v515 = vmul.f32 %v422, 0.5
        %v516 = vmul.f32 %v426, 0.5
        %v517 = vmul.f32 %v428, 0.5
        %v518 = vmul.f32 %v432, 0.5
        %v519 = vmul.f32 %v434, 0.5
        %v520 = vmul.f32 %v438, 0.5
        %v521 = vmul.f32 %v440, 0.5
        %v522 = vmul.f32 %v444, 0.5
        %v523 = vmul.f32 %v446, 0.5
        %v524 = vmul.f32 %v450, 0.5
        %v525 = vmul.f32 %v452, 0.5
        %v526 = vmul.f32 %v456, 0.5
        %v527 = vmul.f32 %v458, 0.5
        %v528 = vmul.f32 %v462, 0.5
        %v529 = vmul.f32 %v464, 0.5
        %v530 = vmul.f32 %v468, 0.5
        %v531 = vmul.f32 %v470, 0.5
        %v532 = vmul.f32 %v474, 0.5
        %v533 = vmul.f32 %v476, 0.5
        %v534 = vmul.f32 %v480, 0.5
        %v535 = vmul.f32 %v482, 0.5
        %v536 = vmul.f32 %v486, 0.5
        %v537 = vmul.f32 %v488, 0.5
        %v538 = vmul.f32 %v492, 0.5
        %v539 = vmul.f32 %v494, 0.5
        %v540 = vmul.f32 %v498, 0.5
        %v541 = vmul.f32 %v500, 0.5
        %v542 = vmul.f32 %v504, 0.5
        %v543 = vmul.f32 %v506, 0.5
        %v544 = vmul.f32 %v510, 0.5
        %v545 = vmul.f32 %v512, 0.5
        %v546 = vmul.f32 %v420, 0.70710677
        %v547 = vmul.f32 %v422, 0.70710677
        %v548 = vmul.f32 %v426, 0.70710677
        %v549 = vmul.f32 %v428, 0.70710677
        %v550 = vmul.f32 %v432, 0.70710677
        %v551 = vmul.f32 %v434, 0.70710677
        %v552 = vmul.f32 %v438, 0.70710677
        %v553 = vmul.f32 %v440, 0.70710677
        %v554 = vmul.f32 %v444, 0.70710677
        %v555 = vmul.f32 %v446, 0.70710677
        %v556 = vmul.f32 %v450, 0.70710677
        %v557 = vmul.f32 %v452, 0.70710677
        %v558 = vmul.f32 %v456, 0.70710677
        %v559 = vmul.f32 %v458, 0.70710677
        %v560 = vmul.f32 %v462, 0.70710677
        %v561 = vmul.f32 %v464, 0.70710677
        %v562 = vmul.f32 %v468, 0.70710677
        %v563 = vmul.f32 %v470, 0.70710677
        %v564 = vmul.f32 %v474, 0.70710677
        %v565 = vmul.f32 %v476, 0.70710677
        %v566 = vmul.f32 %v480, 0.70710677
        %v567 = vmul.f32 %v482, 0.70710677
        %v568 = vmul.f32 %v486, 0.70710677
        %v569 = vmul.f32 %v488, 0.70710677
        %v570 = vmul.f32 %v492, 0.70710677
        %v571 = vmul.f32 %v494, 0.70710677
        %v572 = vmul.f32 %v498, 0.70710677
        %v573 = vmul.f32 %v500, 0.70710677
        %v574 = vmul.f32 %v504, 0.70710677
        %v575 = vmul.f32 %v506, 0.70710677
        %v576 = vmul.f32 %v510, 0.70710677
        %v577 = vmul.f32 %v512, 0.70710677
        %v578 = verf.f32.pop %v546
        %v579 = verf.f32.pop %v547
        %v580 = verf.f32.pop %v548
        %v581 = verf.f32.pop %v549
        %v582 = verf.f32.pop %v550
        %v583 = verf.f32.pop %v551
        %v584 = verf.f32.pop %v552
        %v585 = verf.f32.pop %v553
        %v586 = verf.f32.pop %v554
        %v587 = verf.f32.pop %v555
        %v588 = verf.f32.pop %v556
        %v589 = verf.f32.pop %v557
        %v590 = verf.f32.pop %v558
        %v591 = verf.f32.pop %v559
        %v592 = verf.f32.pop %v560
        %v593 = verf.f32.pop %v561
        %v594 = verf.f32.pop %v562
        %v595 = verf.f32.pop %v563
        %v596 = verf.f32.pop %v564
        %v597 = verf.f32.pop %v565
        %v598 = verf.f32.pop %v566
        %v599 = verf.f32.pop %v567
        %v600 = verf.f32.pop %v568
        %v601 = verf.f32.pop %v569
        %v602 = verf.f32.pop %v570
        %v603 = verf.f32.pop %v571
        %v604 = verf.f32.pop %v572
        %v605 = verf.f32.pop %v573
        %v606 = verf.f32.pop %v574
        %v607 = verf.f32.pop %v575
        %v608 = verf.f32.pop %v576
        %v609 = verf.f32.pop %v577
        %v610 = vadd.f32 %v578, 1.0
        %v611 = vadd.f32 %v579, 1.0
        %v612 = vadd.f32 %v580, 1.0
        %v613 = vadd.f32 %v581, 1.0
        %v614 = vadd.f32 %v582, 1.0
        %v615 = vadd.f32 %v583, 1.0
        %v616 = vadd.f32 %v584, 1.0
        %v617 = vadd.f32 %v585, 1.0
        %v618 = vadd.f32 %v586, 1.0
        %v619 = vadd.f32 %v587, 1.0
        %v620 = vadd.f32 %v588, 1.0
        %v621 = vadd.f32 %v589, 1.0
        %v622 = vadd.f32 %v590, 1.0
        %v623 = vadd.f32 %v591, 1.0
        %v624 = vadd.f32 %v592, 1.0
        %v625 = vadd.f32 %v593, 1.0
        %v626 = vadd.f32 %v594, 1.0
        %v627 = vadd.f32 %v595, 1.0
        %v628 = vadd.f32 %v596, 1.0
        %v629 = vadd.f32 %v597, 1.0
        %v630 = vadd.f32 %v598, 1.0
        %v631 = vadd.f32 %v599, 1.0
        %v632 = vadd.f32 %v600, 1.0
        %v633 = vadd.f32 %v601, 1.0
        %v634 = vadd.f32 %v602, 1.0
        %v635 = vadd.f32 %v603, 1.0
        %v636 = vadd.f32 %v604, 1.0
        %v637 = vadd.f32 %v605, 1.0
        %v638 = vadd.f32 %v606, 1.0
        %v639 = vadd.f32 %v607, 1.0
        %v640 = vadd.f32 %v608, 1.0
        %v641 = vadd.f32 %v609, 1.0
        %v642 = vmul.f32 %v514, %v610
        %v643 = vmul.f32 %v515, %v611
        %v644 = vmul.f32 %v516, %v612
        %v645 = vmul.f32 %v517, %v613
        %v646 = vmul.f32 %v518, %v614
        %v647 = vmul.f32 %v519, %v615
        %v648 = vmul.f32 %v520, %v616
        %v649 = vmul.f32 %v521, %v617
        %v650 = vmul.f32 %v522, %v618
        %v651 = vmul.f32 %v523, %v619
        %v652 = vmul.f32 %v524, %v620
        %v653 = vmul.f32 %v525, %v621
        %v654 = vmul.f32 %v526, %v622
        %v655 = vmul.f32 %v527, %v623
        %v656 = vmul.f32 %v528, %v624
        %v657 = vmul.f32 %v529, %v625
        %v658 = vmul.f32 %v530, %v626
        %v659 = vmul.f32 %v531, %v627
        %v660 = vmul.f32 %v532, %v628
        %v661 = vmul.f32 %v533, %v629
        %v662 = vmul.f32 %v534, %v630
        %v663 = vmul.f32 %v535, %v631
        %v664 = vmul.f32 %v536, %v632
        %v665 = vmul.f32 %v537, %v633
        %v666 = vmul.f32 %v538, %v634
        %v667 = vmul.f32 %v539, %v635
        %v668 = vmul.f32 %v540, %v636
        %v669 = vmul.f32 %v541, %v637
        %v670 = vmul.f32 %v542, %v638
        %v671 = vmul.f32 %v543, %v639
        %v672 = vmul.f32 %v544, %v640
        %v673 = vmul.f32 %v545, %v641
        %674 = vst [vmem:[%s206] sm:$0xff] %v642
        %675 = vst [vmem:[%s206 + $0x8] sm:$0xff] %v643
        %676 = vst [vmem:[%s206 + $0x10] sm:$0xff] %v644
        %677 = vst [vmem:[%s206 + $0x18] sm:$0xff] %v645
        %678 = vst [vmem:[%s206 + $0x20] sm:$0xff] %v646
        %679 = vst [vmem:[%s206 + $0x28] sm:$0xff] %v647
        %680 = vst [vmem:[%s206 + $0x30] sm:$0xff] %v648
        %681 = vst [vmem:[%s206 + $0x38] sm:$0xff] %v649
        %682 = vst [vmem:[%s206 + $0x40] sm:$0xff] %v650
        %683 = vst [vmem:[%s206 + $0x48] sm:$0xff] %v651
        %684 = vst [vmem:[%s206 + $0x50] sm:$0xff] %v652
        %685 = vst [vmem:[%s206 + $0x58] sm:$0xff] %v653
        %686 = vst [vmem:[%s206 + $0x60] sm:$0xff] %v654
        %687 = vst [vmem:[%s206 + $0x68] sm:$0xff] %v655
        %688 = vst [vmem:[%s206 + $0x70] sm:$0xff] %v656
        %689 = vst [vmem:[%s206 + $0x78] sm:$0xff] %v657
        %690 = vst [vmem:[%s206 + $0x80] sm:$0xff] %v658
        %691 = vst [vmem:[%s206 + $0x88] sm:$0xff] %v659
        %692 = vst [vmem:[%s206 + $0x90] sm:$0xff] %v660
        %693 = vst [vmem:[%s206 + $0x98] sm:$0xff] %v661
        %694 = vst [vmem:[%s206 + $0xa0] sm:$0xff] %v662
        %695 = vst [vmem:[%s206 + $0xa8] sm:$0xff] %v663
        %696 = vst [vmem:[%s206 + $0xb0] sm:$0xff] %v664
        %697 = vst [vmem:[%s206 + $0xb8] sm:$0xff] %v665
        %698 = vst [vmem:[%s206 + $0xc0] sm:$0xff] %v666
        %699 = vst [vmem:[%s206 + $0xc8] sm:$0xff] %v667
        %700 = vst [vmem:[%s206 + $0xd0] sm:$0xff] %v668
        %701 = vst [vmem:[%s206 + $0xd8] sm:$0xff] %v669
        %702 = vst [vmem:[%s206 + $0xe0] sm:$0xff] %v670
        %703 = vst [vmem:[%s206 + $0xe8] sm:$0xff] %v671
        %704 = vst [vmem:[%s206 + $0xf0] sm:$0xff] %v672
        %705 = vst [vmem:[%s206 + $0xf8] sm:$0xff] %v673
        %s706 = sand.u32 %s112, 1
        %s707 = scalar_lea.sflag [#allocation4], %s706
        %s708 = sand.u32 %s112, 1
        %s709 = smul.addr %s708, 256
        %s710 = scalar_lea.vmem [#allocation5], %s709
        // Predicated region
        $region37: #{tpu_custom_call.1} parent=31 // pred_check
          %p711 = pneg %p122
        $region38: #{tpu_custom_call.1} parent=31 // pred_check_branch
          %713 = sbr.rel (%p711) target = $region40
        $region39: #{tpu_custom_call.1} parent=31 // pred_region
          %s714 = smul.u32 2, %s25
          %s716 = ssub.s32 4096, 4096
          %717 = vsyncadd %s707, %s716
          %s718 = smul.addr %s24, 32
          %s719 = sadd.s32 %s714, %s718
          %s720 = smul.addr %s719, 128
          %s721 = scalar_lea.hbm %s3, %s720
          %s722 = sshll.u32 %s710, 4
          %s723 = int_to_ptr.vmem [resolvable:$true] %s722
          %728 = dma.vmem_to_hbm [thread:$0]  %s723, 4096, %s721, %s707, 256, 256, 16
        $region40: #{tpu_custom_call.1} parent=31 // pred_fallthru
          _
      $region32: #{tpu_custom_call.1} parent=5 // pred_fallthru
        _
      %p729 = scmp.le.s32.totalorder 2, %s15
      // Predicated region
      $region41: #{tpu_custom_call.1} parent=5 // pred_check
        %p730 = pneg %p729
      $region42: #{tpu_custom_call.1} parent=5 // pred_check_branch
        %732 = sbr.rel (%p730) target = $region44
      $region43: #{tpu_custom_call.1} parent=5 // pred_region
        %s733 = ssub.s32 %s15, 2
        // Predicated region
        $region45: #{tpu_custom_call.1} parent=43 // pred_check
          %p734 = pneg %p128
        $region46: #{tpu_custom_call.1} parent=43 // pred_check_branch
          %736 = sbr.rel (%p734) target = $region48
        $region47: #{tpu_custom_call.1} parent=43 // pred_region
          %s737 = sand.u32 %s113, 1
          %s738 = scalar_lea.sflag [#allocation4], %s737
          %s739 = sand.u32 %s113, 1
          %s740 = smul.addr %s739, 256
          %s741 = scalar_lea.vmem [#allocation5], %s740
          %742 = dma.done %s738, 4096
        $region48: #{tpu_custom_call.1} parent=43 // pred_fallthru
          _
      $region44: #{tpu_custom_call.1} parent=5 // pred_fallthru
        _
    $region6: #{tpu_custom_call.1} parent=1 // loop_footer
      %s19 = sadd.s32 1, %s15
    $region7: #{tpu_custom_call.1} parent=1 // loop_footer_branch
      %14 = sbr.rel target = $region3
    $region8: #{tpu_custom_call.1} parent=1 // loop_exit
      _
    %743 = vsyncpa [#allocation3], 1
    %s744 = scalar_lea.sflag [#allocation3], 1
    %745 = vsyncpa %s744, 1
    %746 = vsyncpa [#allocation4], 1
    %s747 = scalar_lea.sflag [#allocation4], 1
    %748 = vsyncpa %s747, 1

</llo_original>
